<compile_context>
chip_gen: v5e
topology: v5e:2x2
jax: 0.10.0
libtpu: 0.0.40
codegen_flags: <defaults>
</compile_context>

<pallas_src>
import jax
import jax.numpy as jnp
from jax import lax
from jax.experimental import pallas as pl
from jax.experimental.pallas import tpu as pltpu


def _make_fusion_kernel(C, L, K, Cmid):
    pad = K // 2
    w1_off = 2 * K               # fc1 weights start in the SMEM param vector
    w2_off = 2 * K + Cmid * C    # fc2 weights start

    def seg(v, c):               # channel-c lane segment of a flattened (Nb, C*L) slab
        return v[:, c * L:(c + 1) * L]

    def kernel(fre_ref, spa_ref, par_ref, o_ref):
        # fre_ref / spa_ref / o_ref : (Nb, C*L) lane-dense blocks in VMEM
        # par_ref : (2K + 2*C*Cmid,) f32 SMEM scalars:
        #           [conv taps (mean ch), conv taps (max ch), fc1 (Cmid,C), fc2 (C,Cmid)]
        x = fre_ref[...].astype(jnp.float32)
        y = spa_ref[...].astype(jnp.float32)
        nb = x.shape[0]
        d = x - y                                          # (Nb, C*L)

        # ---------------- SpatialAttention(fre - spa) ----------------
        # channel mean / max from static lane segments (no reshape / relayout)
        sum_c = seg(d, 0)
        max_c = seg(d, 0)
        for c in range(1, C):
            dc = seg(d, c)
            sum_c = sum_c + dc
            max_c = jnp.maximum(max_c, dc)
        avg_c = sum_c * (1.0 / C)                          # (Nb, L)

        # K-tap 'same' conv over L via static lane shifts (zero-padded edges)
        def shifted(v, t):                                 # out[:, l] = v[:, l + t]
            if t == 0:
                return v
            if t > 0:
                return jnp.concatenate(
                    [v[:, t:], jnp.zeros((nb, t), v.dtype)], axis=1)
            return jnp.concatenate(
                [jnp.zeros((nb, -t), v.dtype), v[:, :t]], axis=1)

        logit = jnp.zeros((nb, L), jnp.float32)
        for k in range(K):                                 # K static -> fully unrolled
            t = k - pad
            logit = (logit
                     + par_ref[k] * shifted(avg_c, t)          # conv input ch 0: mean
                     + par_ref[K + k] * shifted(max_c, t))     # conv input ch 1: max
        sa = jax.nn.sigmoid(logit)                         # (Nb, L) spatial gate
        sa_full = jnp.concatenate([sa] * C, axis=1)        # tile across channel segments
        s = y + sa_full * d                                # (Nb, C*L) refined feature

        # ---------------- ChannelAttention(spa + refine) ----------------
        # per-channel avg / max pool over L, kept as (Nb, 1) columns
        avg_cols = []
        max_cols = []
        for c in range(C):
            sc = seg(s, c)
            avg_cols.append(jnp.sum(sc, axis=1, keepdims=True) * (1.0 / L))
            max_cols.append(jnp.max(sc, axis=1, keepdims=True))

        # shared bias-free MLP  C -> Cmid -> C  as VPU broadcast-MACs
        # (feature_num is tiny; a 4x4 / 4x2 jnp.dot would waste a full MXU pass)
        def mlp(cols):
            h = []
            for j in range(Cmid):
                acc = cols[0] * par_ref[w1_off + j * C]
                for c in range(1, C):
                    acc = acc + cols[c] * par_ref[w1_off + j * C + c]
                h.append(jnp.maximum(acc, 0.0))            # ReLU
            z = []
            for c in range(C):
                acc = h[0] * par_ref[w2_off + c * Cmid]
                for j in range(1, Cmid):
                    acc = acc + h[j] * par_ref[w2_off + c * Cmid + j]
                z.append(acc)                              # (Nb, 1)
            return z

        z_avg = mlp(avg_cols)
        z_max = mlp(max_cols)

        # channel gate applied segment-by-segment; one lane-dense store
        out_segs = [jax.nn.sigmoid(z_avg[c] + z_max[c]) * seg(s, c) for c in range(C)]
        o_ref[...] = jnp.concatenate(out_segs, axis=1).astype(o_ref.dtype)

    return kernel


def fusion_block(fre, spa, w_sa, w_fc1, w_fc2, *, target_block_bytes=1 << 20):
    """FusionBlock forward.

    fre, spa : (N, C, L) float32 (or bfloat16 on v5e for half the HBM traffic)
    w_sa     : (1, 2, K)  SpatialAttention Conv1d weight (bias-free, odd K)
    w_fc1    : (Cmid, C)  ChannelAttention fc1 weight (bias-free), Cmid = C // r
    w_fc2    : (C, Cmid)  ChannelAttention fc2 weight (bias-free)
    """
    N, C, L = fre.shape
    assert spa.shape == (N, C, L)
    _, two, K = w_sa.shape
    assert two == 2 and K % 2 == 1, "SpatialAttention expects Conv1d(2->1, odd K)"
    Cmid = w_fc1.shape[0]
    assert w_fc1.shape == (Cmid, C) and w_fc2.shape == (C, Cmid)
    CL = C * L

    # All small parameters as SMEM scalars (conv taps + the tiny shared MLP).
    params = jnp.concatenate([
        w_sa.reshape(2 * K).astype(jnp.float32),
        w_fc1.reshape(Cmid * C).astype(jnp.float32),
        w_fc2.reshape(C * Cmid).astype(jnp.float32),
    ])

    # Lane-dense layout: operate on (N, C*L) slabs (free wrapper-side reshape).
    fre2 = fre.reshape(N, CL)
    spa2 = spa.reshape(N, CL)

    # Batch block size: ~1 MiB per input block keeps the full pipeline footprint
    # (2 inputs + 1 output, double-buffered, plus d/s temporaries) well inside
    # v5e's 16 MiB and v7x's 32 MiB default scoped-VMEM budgets while still being
    # at/above the measured ~85%-of-HBM-roofline tile size.
    bytes_per_row = CL * fre.dtype.itemsize
    nb = int(max(1, min(N, target_block_bytes // max(bytes_per_row, 1))))
    if nb < N:
        nb = max(8, (nb // 8) * 8)     # keep the sublane dim of the block 8-aligned
        nb = min(nb, N)
    grid = (pl.cdiv(N, nb),)

    cost = pl.CostEstimate(
        flops=N * (10 * CL + 4 * K * L + 8 * C * Cmid + 4 * C),
        transcendentals=N * (L + C),
        bytes_accessed=3 * N * CL * fre.dtype.itemsize + params.size * 4,
    )

    out2 = pl.pallas_call(
        _make_fusion_kernel(C, L, K, Cmid),
        out_shape=jax.ShapeDtypeStruct((N, CL), fre.dtype),
        grid=grid,
        in_specs=[
            pl.BlockSpec((nb, CL), lambda i: (i, 0)),              # fre (flattened)
            pl.BlockSpec((nb, CL), lambda i: (i, 0)),              # spa (flattened)
            pl.BlockSpec(memory_space=pltpu.MemorySpace.SMEM),     # params (resident)
        ],
        out_specs=pl.BlockSpec((nb, CL), lambda i: (i, 0)),
        compiler_params=pltpu.CompilerParams(
            dimension_semantics=("parallel",),      # megacore-shard the batch on v7x
            vmem_limit_bytes=32 * 1024 * 1024,      # headroom over v5e's 16 MiB default
        ),
        cost_estimate=cost,
    )(fre2, spa2, params)
    # TODO(synk): if the xprof trace shows exposed DMA at large N (per-block compute
    # is light), sweep pipeline_mode=pl.Buffered(3) on the fre/spa in_specs.

    return out2.reshape(N, C, L)


def _ref_fusion_block(fre, spa, w_sa, w_fc1, w_fc2):
    """Plain-JAX reference of FusionBlock (canonical CBAM-1D SA + CA)."""
    K = w_sa.shape[-1]
    pad = K // 2
    d = fre - spa
    cat = jnp.concatenate(
        [jnp.mean(d, axis=1, keepdims=True), jnp.max(d, axis=1, keepdims=True)],
        axis=1)                                              # (N, 2, L)
    logit = lax.conv_general_dilated(
        cat, w_sa, window_strides=(1,), padding=[(pad, pad)],
        dimension_numbers=("NCH", "OIH", "NCH"))             # (N, 1, L)
    s = spa + jax.nn.sigmoid(logit) * d                      # (N, C, L)
    avg_p = jnp.mean(s, axis=2)
    max_p = jnp.max(s, axis=2)
    mlp = lambda v: jnp.maximum(v @ w_fc1.T, 0.0) @ w_fc2.T
    ca = jax.nn.sigmoid(mlp(avg_p) + mlp(max_p))             # (N, C)
    return ca[:, :, None] * s


if __name__ == "__main__":
    # FusionBlock(window_size=16, kernel_size=3, feature_num=4, r=2), batch=2.
    window_size, kernel_size, feature_num, r, batch = 16, 3, 4, 2, 2
    mid = feature_num // r

    key = jax.random.PRNGKey(0)
    kf, ks, kw, k1, k2 = jax.random.split(key, 5)
    fre = jax.random.normal(kf, (batch, feature_num, window_size), jnp.float32)
    spa = jax.random.normal(ks, (batch, feature_num, window_size), jnp.float32)
    w_sa = jax.random.normal(kw, (1, 2, kernel_size), jnp.float32) * 0.3
    w_fc1 = jax.random.normal(k1, (mid, feature_num), jnp.float32) * 0.3
    w_fc2 = jax.random.normal(k2, (feature_num, mid), jnp.float32) * 0.3

    out = jax.block_until_ready(fusion_block(fre, spa, w_sa, w_fc1, w_fc2))

    ref = _ref_fusion_block(fre, spa, w_sa, w_fc1, w_fc2)
    assert out.shape == ref.shape
    assert jnp.allclose(out, ref, atol=1e-5, rtol=1e-5), "mismatch vs reference"

    print("KERNEL_OK")
</pallas_src>

<mosaic_0001>
module attributes {stable_mosaic.version = 11 : i64} {
  func.func @kernel(%arg0: i32, %arg1: memref<2x64xf32, #tpu.memory_space<vmem>>, %arg2: memref<2x64xf32, #tpu.memory_space<vmem>>, %arg3: memref<22xf32, #tpu.memory_space<smem>>, %arg4: memref<2x64xf32, #tpu.memory_space<vmem>>) attributes {dimension_semantics = [#tpu.dimension_semantics<parallel>], iteration_bounds = array<i64: 1>, scalar_prefetch = 0 : i64, scratch_operands = 0 : i64, tpu.core_type = #tpu.core_type<tc>, window_params = [{transform_indices = @transform_0, window_bounds = array<i64: 2, 64>}, {transform_indices = @transform_1, window_bounds = array<i64: 2, 64>}, {transform_indices = @transform_2, window_bounds = array<i64: 22>}, {transform_indices = @transform_3, window_bounds = array<i64: 2, 64>}]} {
    %c0 = arith.constant 0 : index
    %c0_0 = arith.constant 0 : index
    %0 = vector.load %arg1[%c0, %c0_0] : memref<2x64xf32, #tpu.memory_space<vmem>>, vector<2x64xf32>
    %c0_1 = arith.constant 0 : index
    %c0_2 = arith.constant 0 : index
    %1 = vector.load %arg2[%c0_1, %c0_2] : memref<2x64xf32, #tpu.memory_space<vmem>>, vector<2x64xf32>
    %2 = arith.subf %0, %1 : vector<2x64xf32>
    %3 = vector.extract_strided_slice %2 {offsets = [0, 0], sizes = [2, 16], strides = [1, 1]} : vector<2x64xf32> to vector<2x16xf32>
    %4 = vector.extract_strided_slice %2 {offsets = [0, 0], sizes = [2, 16], strides = [1, 1]} : vector<2x64xf32> to vector<2x16xf32>
    %5 = vector.extract_strided_slice %2 {offsets = [0, 16], sizes = [2, 16], strides = [1, 1]} : vector<2x64xf32> to vector<2x16xf32>
    %6 = arith.addf %3, %5 : vector<2x16xf32>
    %7 = arith.maximumf %4, %5 : vector<2x16xf32>
    %8 = vector.extract_strided_slice %2 {offsets = [0, 32], sizes = [2, 16], strides = [1, 1]} : vector<2x64xf32> to vector<2x16xf32>
    %9 = arith.addf %6, %8 : vector<2x16xf32>
    %10 = arith.maximumf %7, %8 : vector<2x16xf32>
    %11 = vector.extract_strided_slice %2 {offsets = [0, 48], sizes = [2, 16], strides = [1, 1]} : vector<2x64xf32> to vector<2x16xf32>
    %12 = arith.addf %9, %11 : vector<2x16xf32>
    %13 = arith.maximumf %10, %11 : vector<2x16xf32>
    %cst = arith.constant 2.500000e-01 : f32
    %14 = vector.broadcast %cst : f32 to vector<2x16xf32>
    %15 = arith.mulf %12, %14 : vector<2x16xf32>
    %cst_3 = arith.constant 0.000000e+00 : f32
    %16 = vector.broadcast %cst_3 : f32 to vector<2x16xf32>
    %c0_4 = arith.constant 0 : index
    %17 = memref.load %arg3[%c0_4] : memref<22xf32, #tpu.memory_space<smem>>
    %cst_5 = arith.constant 0.000000e+00 : f32
    %18 = vector.broadcast %cst_5 : f32 to vector<2x1xf32>
    %19 = vector.extract_strided_slice %15 {offsets = [0, 0], sizes = [2, 15], strides = [1, 1]} : vector<2x16xf32> to vector<2x15xf32>
    %20 = tpu.concatenate %18, %19 in 1 : vector<2x1xf32>, vector<2x15xf32> -> vector<2x16xf32>
    %21 = vector.broadcast %17 : f32 to vector<2x16xf32>
    %22 = arith.mulf %21, %20 : vector<2x16xf32>
    %23 = arith.addf %16, %22 : vector<2x16xf32>
    %c3 = arith.constant 3 : index
    %24 = memref.load %arg3[%c3] : memref<22xf32, #tpu.memory_space<smem>>
    %cst_6 = arith.constant 0.000000e+00 : f32
    %25 = vector.broadcast %cst_6 : f32 to vector<2x1xf32>
    %26 = vector.extract_strided_slice %13 {offsets = [0, 0], sizes = [2, 15], strides = [1, 1]} : vector<2x16xf32> to vector<2x15xf32>
    %27 = tpu.concatenate %25, %26 in 1 : vector<2x1xf32>, vector<2x15xf32> -> vector<2x16xf32>
    %28 = vector.broadcast %24 : f32 to vector<2x16xf32>
    %29 = arith.mulf %28, %27 : vector<2x16xf32>
    %30 = arith.addf %23, %29 : vector<2x16xf32>
    %c1 = arith.constant 1 : index
    %31 = memref.load %arg3[%c1] : memref<22xf32, #tpu.memory_space<smem>>
    %32 = vector.broadcast %31 : f32 to vector<2x16xf32>
    %33 = arith.mulf %32, %15 : vector<2x16xf32>
    %34 = arith.addf %30, %33 : vector<2x16xf32>
    %c4 = arith.constant 4 : index
    %35 = memref.load %arg3[%c4] : memref<22xf32, #tpu.memory_space<smem>>
    %36 = vector.broadcast %35 : f32 to vector<2x16xf32>
    %37 = arith.mulf %36, %13 : vector<2x16xf32>
    %38 = arith.addf %34, %37 : vector<2x16xf32>
    %c2 = arith.constant 2 : index
    %39 = memref.load %arg3[%c2] : memref<22xf32, #tpu.memory_space<smem>>
    %40 = vector.extract_strided_slice %15 {offsets = [0, 1], sizes = [2, 15], strides = [1, 1]} : vector<2x16xf32> to vector<2x15xf32>
    %cst_7 = arith.constant 0.000000e+00 : f32
    %41 = vector.broadcast %cst_7 : f32 to vector<2x1xf32>
    %42 = tpu.concatenate %40, %41 in 1 : vector<2x15xf32>, vector<2x1xf32> -> vector<2x16xf32>
    %43 = vector.broadcast %39 : f32 to vector<2x16xf32>
    %44 = arith.mulf %43, %42 : vector<2x16xf32>
    %45 = arith.addf %38, %44 : vector<2x16xf32>
    %c5 = arith.constant 5 : index
    %46 = memref.load %arg3[%c5] : memref<22xf32, #tpu.memory_space<smem>>
    %47 = vector.extract_strided_slice %13 {offsets = [0, 1], sizes = [2, 15], strides = [1, 1]} : vector<2x16xf32> to vector<2x15xf32>
    %cst_8 = arith.constant 0.000000e+00 : f32
    %48 = vector.broadcast %cst_8 : f32 to vector<2x1xf32>
    %49 = tpu.concatenate %47, %48 in 1 : vector<2x15xf32>, vector<2x1xf32> -> vector<2x16xf32>
    %50 = vector.broadcast %46 : f32 to vector<2x16xf32>
    %51 = arith.mulf %50, %49 : vector<2x16xf32>
    %52 = arith.addf %45, %51 : vector<2x16xf32>
    %53 = arith.negf %52 : vector<2x16xf32>
    %54 = math.exp %53 : vector<2x16xf32>
    %cst_9 = arith.constant 1.000000e+00 : f32
    %55 = vector.broadcast %cst_9 : f32 to vector<2x16xf32>
    %56 = arith.addf %55, %54 : vector<2x16xf32>
    %57 = arith.divf %55, %56 : vector<2x16xf32>
    %58 = tpu.concatenate %57, %57, %57, %57 in 1 : vector<2x16xf32>, vector<2x16xf32>, vector<2x16xf32>, vector<2x16xf32> -> vector<2x64xf32>
    %59 = arith.mulf %58, %2 : vector<2x64xf32>
    %60 = arith.addf %1, %59 : vector<2x64xf32>
    %61 = vector.extract_strided_slice %60 {offsets = [0, 0], sizes = [2, 16], strides = [1, 1]} : vector<2x64xf32> to vector<2x16xf32>
    %cst_10 = arith.constant dense<0.000000e+00> : vector<2xf32>
    %62 = vector.multi_reduction <add>, %61, %cst_10 [1] : vector<2x16xf32> to vector<2xf32>
    %63 = vector.shape_cast %62 : vector<2xf32> to vector<2x1xf32>
    %cst_11 = arith.constant 6.250000e-02 : f32
    %64 = vector.broadcast %cst_11 : f32 to vector<2x1xf32>
    %65 = arith.mulf %63, %64 : vector<2x1xf32>
    %cst_12 = arith.constant dense<0xFF800000> : vector<2xf32>
    %66 = vector.multi_reduction <maximumf>, %61, %cst_12 [1] : vector<2x16xf32> to vector<2xf32>
    %67 = vector.shape_cast %66 : vector<2xf32> to vector<2x1xf32>
    %68 = vector.extract_strided_slice %60 {offsets = [0, 16], sizes = [2, 16], strides = [1, 1]} : vector<2x64xf32> to vector<2x16xf32>
    %cst_13 = arith.constant dense<0.000000e+00> : vector<2xf32>
    %69 = vector.multi_reduction <add>, %68, %cst_13 [1] : vector<2x16xf32> to vector<2xf32>
    %70 = vector.shape_cast %69 : vector<2xf32> to vector<2x1xf32>
    %cst_14 = arith.constant 6.250000e-02 : f32
    %71 = vector.broadcast %cst_14 : f32 to vector<2x1xf32>
    %72 = arith.mulf %70, %71 : vector<2x1xf32>
    %cst_15 = arith.constant dense<0xFF800000> : vector<2xf32>
    %73 = vector.multi_reduction <maximumf>, %68, %cst_15 [1] : vector<2x16xf32> to vector<2xf32>
    %74 = vector.shape_cast %73 : vector<2xf32> to vector<2x1xf32>
    %75 = vector.extract_strided_slice %60 {offsets = [0, 32], sizes = [2, 16], strides = [1, 1]} : vector<2x64xf32> to vector<2x16xf32>
    %cst_16 = arith.constant dense<0.000000e+00> : vector<2xf32>
    %76 = vector.multi_reduction <add>, %75, %cst_16 [1] : vector<2x16xf32> to vector<2xf32>
    %77 = vector.shape_cast %76 : vector<2xf32> to vector<2x1xf32>
    %cst_17 = arith.constant 6.250000e-02 : f32
    %78 = vector.broadcast %cst_17 : f32 to vector<2x1xf32>
    %79 = arith.mulf %77, %78 : vector<2x1xf32>
    %cst_18 = arith.constant dense<0xFF800000> : vector<2xf32>
    %80 = vector.multi_reduction <maximumf>, %75, %cst_18 [1] : vector<2x16xf32> to vector<2xf32>
    %81 = vector.shape_cast %80 : vector<2xf32> to vector<2x1xf32>
    %82 = vector.extract_strided_slice %60 {offsets = [0, 48], sizes = [2, 16], strides = [1, 1]} : vector<2x64xf32> to vector<2x16xf32>
    %cst_19 = arith.constant dense<0.000000e+00> : vector<2xf32>
    %83 = vector.multi_reduction <add>, %82, %cst_19 [1] : vector<2x16xf32> to vector<2xf32>
    %84 = vector.shape_cast %83 : vector<2xf32> to vector<2x1xf32>
    %cst_20 = arith.constant 6.250000e-02 : f32
    %85 = vector.broadcast %cst_20 : f32 to vector<2x1xf32>
    %86 = arith.mulf %84, %85 : vector<2x1xf32>
    %cst_21 = arith.constant dense<0xFF800000> : vector<2xf32>
    %87 = vector.multi_reduction <maximumf>, %82, %cst_21 [1] : vector<2x16xf32> to vector<2xf32>
    %88 = vector.shape_cast %87 : vector<2xf32> to vector<2x1xf32>
    %c6 = arith.constant 6 : index
    %89 = memref.load %arg3[%c6] : memref<22xf32, #tpu.memory_space<smem>>
    %90 = vector.broadcast %89 : f32 to vector<2x1xf32>
    %91 = arith.mulf %65, %90 : vector<2x1xf32>
    %c7 = arith.constant 7 : index
    %92 = memref.load %arg3[%c7] : memref<22xf32, #tpu.memory_space<smem>>
    %93 = vector.broadcast %92 : f32 to vector<2x1xf32>
    %94 = arith.mulf %72, %93 : vector<2x1xf32>
    %95 = arith.addf %91, %94 : vector<2x1xf32>
    %c8 = arith.constant 8 : index
    %96 = memref.load %arg3[%c8] : memref<22xf32, #tpu.memory_space<smem>>
    %97 = vector.broadcast %96 : f32 to vector<2x1xf32>
    %98 = arith.mulf %79, %97 : vector<2x1xf32>
    %99 = arith.addf %95, %98 : vector<2x1xf32>
    %c9 = arith.constant 9 : index
    %100 = memref.load %arg3[%c9] : memref<22xf32, #tpu.memory_space<smem>>
    %101 = vector.broadcast %100 : f32 to vector<2x1xf32>
    %102 = arith.mulf %86, %101 : vector<2x1xf32>
    %103 = arith.addf %99, %102 : vector<2x1xf32>
    %cst_22 = arith.constant 0.000000e+00 : f32
    %104 = vector.broadcast %cst_22 : f32 to vector<2x1xf32>
    %105 = arith.maximumf %103, %104 : vector<2x1xf32>
    %c10 = arith.constant 10 : index
    %106 = memref.load %arg3[%c10] : memref<22xf32, #tpu.memory_space<smem>>
    %107 = vector.broadcast %106 : f32 to vector<2x1xf32>
    %108 = arith.mulf %65, %107 : vector<2x1xf32>
    %c11 = arith.constant 11 : index
    %109 = memref.load %arg3[%c11] : memref<22xf32, #tpu.memory_space<smem>>
    %110 = vector.broadcast %109 : f32 to vector<2x1xf32>
    %111 = arith.mulf %72, %110 : vector<2x1xf32>
    %112 = arith.addf %108, %111 : vector<2x1xf32>
    %c12 = arith.constant 12 : index
    %113 = memref.load %arg3[%c12] : memref<22xf32, #tpu.memory_space<smem>>
    %114 = vector.broadcast %113 : f32 to vector<2x1xf32>
    %115 = arith.mulf %79, %114 : vector<2x1xf32>
    %116 = arith.addf %112, %115 : vector<2x1xf32>
    %c13 = arith.constant 13 : index
    %117 = memref.load %arg3[%c13] : memref<22xf32, #tpu.memory_space<smem>>
    %118 = vector.broadcast %117 : f32 to vector<2x1xf32>
    %119 = arith.mulf %86, %118 : vector<2x1xf32>
    %120 = arith.addf %116, %119 : vector<2x1xf32>
    %cst_23 = arith.constant 0.000000e+00 : f32
    %121 = vector.broadcast %cst_23 : f32 to vector<2x1xf32>
    %122 = arith.maximumf %120, %121 : vector<2x1xf32>
    %c14 = arith.constant 14 : index
    %123 = memref.load %arg3[%c14] : memref<22xf32, #tpu.memory_space<smem>>
    %124 = vector.broadcast %123 : f32 to vector<2x1xf32>
    %125 = arith.mulf %105, %124 : vector<2x1xf32>
    %c15 = arith.constant 15 : index
    %126 = memref.load %arg3[%c15] : memref<22xf32, #tpu.memory_space<smem>>
    %127 = vector.broadcast %126 : f32 to vector<2x1xf32>
    %128 = arith.mulf %122, %127 : vector<2x1xf32>
    %129 = arith.addf %125, %128 : vector<2x1xf32>
    %c16 = arith.constant 16 : index
    %130 = memref.load %arg3[%c16] : memref<22xf32, #tpu.memory_space<smem>>
    %131 = vector.broadcast %130 : f32 to vector<2x1xf32>
    %132 = arith.mulf %105, %131 : vector<2x1xf32>
    %c17 = arith.constant 17 : index
    %133 = memref.load %arg3[%c17] : memref<22xf32, #tpu.memory_space<smem>>
    %134 = vector.broadcast %133 : f32 to vector<2x1xf32>
    %135 = arith.mulf %122, %134 : vector<2x1xf32>
    %136 = arith.addf %132, %135 : vector<2x1xf32>
    %c18 = arith.constant 18 : index
    %137 = memref.load %arg3[%c18] : memref<22xf32, #tpu.memory_space<smem>>
    %138 = vector.broadcast %137 : f32 to vector<2x1xf32>
    %139 = arith.mulf %105, %138 : vector<2x1xf32>
    %c19 = arith.constant 19 : index
    %140 = memref.load %arg3[%c19] : memref<22xf32, #tpu.memory_space<smem>>
    %141 = vector.broadcast %140 : f32 to vector<2x1xf32>
    %142 = arith.mulf %122, %141 : vector<2x1xf32>
    %143 = arith.addf %139, %142 : vector<2x1xf32>
    %c20 = arith.constant 20 : index
    %144 = memref.load %arg3[%c20] : memref<22xf32, #tpu.memory_space<smem>>
    %145 = vector.broadcast %144 : f32 to vector<2x1xf32>
    %146 = arith.mulf %105, %145 : vector<2x1xf32>
    %c21 = arith.constant 21 : index
    %147 = memref.load %arg3[%c21] : memref<22xf32, #tpu.memory_space<smem>>
    %148 = vector.broadcast %147 : f32 to vector<2x1xf32>
    %149 = arith.mulf %122, %148 : vector<2x1xf32>
    %150 = arith.addf %146, %149 : vector<2x1xf32>
    %c6_24 = arith.constant 6 : index
    %151 = memref.load %arg3[%c6_24] : memref<22xf32, #tpu.memory_space<smem>>
    %152 = vector.broadcast %151 : f32 to vector<2x1xf32>
    %153 = arith.mulf %67, %152 : vector<2x1xf32>
    %c7_25 = arith.constant 7 : index
    %154 = memref.load %arg3[%c7_25] : memref<22xf32, #tpu.memory_space<smem>>
    %155 = vector.broadcast %154 : f32 to vector<2x1xf32>
    %156 = arith.mulf %74, %155 : vector<2x1xf32>
    %157 = arith.addf %153, %156 : vector<2x1xf32>
    %c8_26 = arith.constant 8 : index
    %158 = memref.load %arg3[%c8_26] : memref<22xf32, #tpu.memory_space<smem>>
    %159 = vector.broadcast %158 : f32 to vector<2x1xf32>
    %160 = arith.mulf %81, %159 : vector<2x1xf32>
    %161 = arith.addf %157, %160 : vector<2x1xf32>
    %c9_27 = arith.constant 9 : index
    %162 = memref.load %arg3[%c9_27] : memref<22xf32, #tpu.memory_space<smem>>
    %163 = vector.broadcast %162 : f32 to vector<2x1xf32>
    %164 = arith.mulf %88, %163 : vector<2x1xf32>
    %165 = arith.addf %161, %164 : vector<2x1xf32>
    %cst_28 = arith.constant 0.000000e+00 : f32
    %166 = vector.broadcast %cst_28 : f32 to vector<2x1xf32>
    %167 = arith.maximumf %165, %166 : vector<2x1xf32>
    %c10_29 = arith.constant 10 : index
    %168 = memref.load %arg3[%c10_29] : memref<22xf32, #tpu.memory_space<smem>>
    %169 = vector.broadcast %168 : f32 to vector<2x1xf32>
    %170 = arith.mulf %67, %169 : vector<2x1xf32>
    %c11_30 = arith.constant 11 : index
    %171 = memref.load %arg3[%c11_30] : memref<22xf32, #tpu.memory_space<smem>>
    %172 = vector.broadcast %171 : f32 to vector<2x1xf32>
    %173 = arith.mulf %74, %172 : vector<2x1xf32>
    %174 = arith.addf %170, %173 : vector<2x1xf32>
    %c12_31 = arith.constant 12 : index
    %175 = memref.load %arg3[%c12_31] : memref<22xf32, #tpu.memory_space<smem>>
    %176 = vector.broadcast %175 : f32 to vector<2x1xf32>
    %177 = arith.mulf %81, %176 : vector<2x1xf32>
    %178 = arith.addf %174, %177 : vector<2x1xf32>
    %c13_32 = arith.constant 13 : index
    %179 = memref.load %arg3[%c13_32] : memref<22xf32, #tpu.memory_space<smem>>
    %180 = vector.broadcast %179 : f32 to vector<2x1xf32>
    %181 = arith.mulf %88, %180 : vector<2x1xf32>
    %182 = arith.addf %178, %181 : vector<2x1xf32>
    %cst_33 = arith.constant 0.000000e+00 : f32
    %183 = vector.broadcast %cst_33 : f32 to vector<2x1xf32>
    %184 = arith.maximumf %182, %183 : vector<2x1xf32>
    %c14_34 = arith.constant 14 : index
    %185 = memref.load %arg3[%c14_34] : memref<22xf32, #tpu.memory_space<smem>>
    %186 = vector.broadcast %185 : f32 to vector<2x1xf32>
    %187 = arith.mulf %167, %186 : vector<2x1xf32>
    %c15_35 = arith.constant 15 : index
    %188 = memref.load %arg3[%c15_35] : memref<22xf32, #tpu.memory_space<smem>>
    %189 = vector.broadcast %188 : f32 to vector<2x1xf32>
    %190 = arith.mulf %184, %189 : vector<2x1xf32>
    %191 = arith.addf %187, %190 : vector<2x1xf32>
    %c16_36 = arith.constant 16 : index
    %192 = memref.load %arg3[%c16_36] : memref<22xf32, #tpu.memory_space<smem>>
    %193 = vector.broadcast %192 : f32 to vector<2x1xf32>
    %194 = arith.mulf %167, %193 : vector<2x1xf32>
    %c17_37 = arith.constant 17 : index
    %195 = memref.load %arg3[%c17_37] : memref<22xf32, #tpu.memory_space<smem>>
    %196 = vector.broadcast %195 : f32 to vector<2x1xf32>
    %197 = arith.mulf %184, %196 : vector<2x1xf32>
    %198 = arith.addf %194, %197 : vector<2x1xf32>
    %c18_38 = arith.constant 18 : index
    %199 = memref.load %arg3[%c18_38] : memref<22xf32, #tpu.memory_space<smem>>
    %200 = vector.broadcast %199 : f32 to vector<2x1xf32>
    %201 = arith.mulf %167, %200 : vector<2x1xf32>
    %c19_39 = arith.constant 19 : index
    %202 = memref.load %arg3[%c19_39] : memref<22xf32, #tpu.memory_space<smem>>
    %203 = vector.broadcast %202 : f32 to vector<2x1xf32>
    %204 = arith.mulf %184, %203 : vector<2x1xf32>
    %205 = arith.addf %201, %204 : vector<2x1xf32>
    %c20_40 = arith.constant 20 : index
    %206 = memref.load %arg3[%c20_40] : memref<22xf32, #tpu.memory_space<smem>>
    %207 = vector.broadcast %206 : f32 to vector<2x1xf32>
    %208 = arith.mulf %167, %207 : vector<2x1xf32>
    %c21_41 = arith.constant 21 : index
    %209 = memref.load %arg3[%c21_41] : memref<22xf32, #tpu.memory_space<smem>>
    %210 = vector.broadcast %209 : f32 to vector<2x1xf32>
    %211 = arith.mulf %184, %210 : vector<2x1xf32>
    %212 = arith.addf %208, %211 : vector<2x1xf32>
    %213 = arith.addf %129, %191 : vector<2x1xf32>
    %214 = arith.negf %213 : vector<2x1xf32>
    %215 = math.exp %214 : vector<2x1xf32>
    %cst_42 = arith.constant 1.000000e+00 : f32
    %216 = vector.broadcast %cst_42 : f32 to vector<2x1xf32>
    %217 = arith.addf %216, %215 : vector<2x1xf32>
    %218 = arith.divf %216, %217 : vector<2x1xf32>
    %219 = vector.extract_strided_slice %60 {offsets = [0, 0], sizes = [2, 16], strides = [1, 1]} : vector<2x64xf32> to vector<2x16xf32>
    %220 = vector.broadcast %218 : vector<2x1xf32> to vector<2x16xf32>
    %221 = arith.mulf %220, %219 : vector<2x16xf32>
    %222 = arith.addf %136, %198 : vector<2x1xf32>
    %223 = arith.negf %222 : vector<2x1xf32>
    %224 = math.exp %223 : vector<2x1xf32>
    %cst_43 = arith.constant 1.000000e+00 : f32
    %225 = vector.broadcast %cst_43 : f32 to vector<2x1xf32>
    %226 = arith.addf %225, %224 : vector<2x1xf32>
    %227 = arith.divf %225, %226 : vector<2x1xf32>
    %228 = vector.extract_strided_slice %60 {offsets = [0, 16], sizes = [2, 16], strides = [1, 1]} : vector<2x64xf32> to vector<2x16xf32>
    %229 = vector.broadcast %227 : vector<2x1xf32> to vector<2x16xf32>
    %230 = arith.mulf %229, %228 : vector<2x16xf32>
    %231 = arith.addf %143, %205 : vector<2x1xf32>
    %232 = arith.negf %231 : vector<2x1xf32>
    %233 = math.exp %232 : vector<2x1xf32>
    %cst_44 = arith.constant 1.000000e+00 : f32
    %234 = vector.broadcast %cst_44 : f32 to vector<2x1xf32>
    %235 = arith.addf %234, %233 : vector<2x1xf32>
    %236 = arith.divf %234, %235 : vector<2x1xf32>
    %237 = vector.extract_strided_slice %60 {offsets = [0, 32], sizes = [2, 16], strides = [1, 1]} : vector<2x64xf32> to vector<2x16xf32>
    %238 = vector.broadcast %236 : vector<2x1xf32> to vector<2x16xf32>
    %239 = arith.mulf %238, %237 : vector<2x16xf32>
    %240 = arith.addf %150, %212 : vector<2x1xf32>
    %241 = arith.negf %240 : vector<2x1xf32>
    %242 = math.exp %241 : vector<2x1xf32>
    %cst_45 = arith.constant 1.000000e+00 : f32
    %243 = vector.broadcast %cst_45 : f32 to vector<2x1xf32>
    %244 = arith.addf %243, %242 : vector<2x1xf32>
    %245 = arith.divf %243, %244 : vector<2x1xf32>
    %246 = vector.extract_strided_slice %60 {offsets = [0, 48], sizes = [2, 16], strides = [1, 1]} : vector<2x64xf32> to vector<2x16xf32>
    %247 = vector.broadcast %245 : vector<2x1xf32> to vector<2x16xf32>
    %248 = arith.mulf %247, %246 : vector<2x16xf32>
    %249 = tpu.concatenate %221, %230, %239, %248 in 1 : vector<2x16xf32>, vector<2x16xf32>, vector<2x16xf32>, vector<2x16xf32> -> vector<2x64xf32>
    %c0_46 = arith.constant 0 : index
    %c0_47 = arith.constant 0 : index
    %250 = vector.load %arg4[%c0_46, %c0_47] : memref<2x64xf32, #tpu.memory_space<vmem>>, vector<2x64xf32>
    tpu.vector_store %arg4[%c0_46, %c0_47], %249 {strides = array<i32>} : memref<2x64xf32, #tpu.memory_space<vmem>>, vector<2x64xf32>,
    return
  }
  func.func @transform_0(%arg0: i32) -> (i32, i32) {
    %c0_i32 = arith.constant 0 : i32
    %c0_i32_0 = arith.constant 0 : i32
    return %arg0, %c0_i32 : i32, i32
  }
  func.func @transform_1(%arg0: i32) -> (i32, i32) {
    %c0_i32 = arith.constant 0 : i32
    %c0_i32_0 = arith.constant 0 : i32
    return %arg0, %c0_i32 : i32, i32
  }
  func.func @transform_2(%arg0: i32) -> i32 {
    %c0_i32 = arith.constant 0 : i32
    %c0_i32_0 = arith.constant 0 : i32
    return %c0_i32 : i32
  }
  func.func @transform_3(%arg0: i32) -> (i32, i32) {
    %c0_i32 = arith.constant 0 : i32
    %c0_i32_0 = arith.constant 0 : i32
    return %arg0, %c0_i32 : i32, i32
  }
}

</mosaic_0001>

<llo_original>
// kernel: tpu_custom_call.1
$region0: #{tpu_custom_call.1}
  #allocation0 [shape = 'u32[]', space=smem, size = 0x4, offset = 0x4, fixed_abs, tag = 'smem constant byte address 0x4 - core index']
  #allocation1 [shape = 'u32[72,128]{1,0:T(1,128)}', space=vmem, size = 0x9000, scoped, tag = 'internal scratch']
  %s0 = inlined_call_operand.hbm [shape: f32[2,64], index: 0, kind: input, shape index: {}]
  %s1 = inlined_call_operand.hbm [shape: f32[2,64], index: 1, kind: input, shape index: {}]
  %s2 = inlined_call_operand.vmem [shape: f32[22], index: 2, kind: input, shape index: {}]
  %s3 = inlined_call_operand.hbm [shape: f32[2,64], index: 3, kind: output, shape index: {}]
  %s4 = sld [smem:[#allocation0]]
  $region34: #{tpu_custom_call.1} parent=0
    _
  %s6 = ssub.s32 1, %s4
  %s7 = scalar_select 0, %s6, %s4
  $region1: #{tpu_custom_call.1} parent=0
    #allocation2 [shape = 'u8[1024]{0}', space=vmem, size = 0x400, scoped, tag = 'input window, operand 0, single buffered']
    #allocation3 [shape = 's32[1]{0}', space=sflag, size = 0x4, scoped, tag = 'scoped memory for tpu_custom_call.1']
    #allocation4 [shape = 's32[1]{0}', space=sflag, size = 0x4, scoped, tag = 'scoped memory for tpu_custom_call.1']
    #allocation5 [shape = 's32[1]{0}', space=sflag, size = 0x4, scoped, tag = 'scoped memory for tpu_custom_call.1']
    #allocation6 [shape = 'u8[1024]{0}', space=vmem, size = 0x400, scoped, tag = 'input window, operand 1, single buffered']
    #allocation7 [shape = 's32[1]{0}', space=sflag, size = 0x4, scoped, tag = 'scoped memory for tpu_custom_call.1']
    #allocation8 [shape = 'u8[512]{0}', space=smem, size = 0x200, scoped, tag = 'input window, operand 2, single buffered']
    #allocation9 [shape = 'u8[1024]{0}', space=vmem, size = 0x400, scoped, tag = 'output window, operand 0, single buffered']
    %8 = vsyncpa [#allocation3], 0
    %9 = vsyncpa [#allocation7], 0
    %10 = vsyncpa [#allocation5], 0
    %11 = vsyncpa [#allocation4], 0
    // Predicated region
    $region2: #{tpu_custom_call.1} parent=1 // pred_check
      _
    $region3: #{tpu_custom_call.1} parent=1 // pred_check_branch
      %13 = sbr.rel (0) target = $region5
    $region4: #{tpu_custom_call.1} parent=1 // pred_region
      %15 = vsyncadd [#allocation3], 0
      %s17 = sshll.u32 %s0, 4
      %s18 = int_to_ptr.hbm [resolvable:$true] %s17
      %s19 = sshll.u32 [#allocation2], 4
      %s20 = int_to_ptr.vmem [resolvable:$true] %s19
      %22 = dma.hbm_to_vmem [thread:$0]  %s18, 32, %s20, [#allocation3]
    $region5: #{tpu_custom_call.1} parent=1 // pred_fallthru
      _
    // Predicated region
    $region6: #{tpu_custom_call.1} parent=1 // pred_check
      _
    $region7: #{tpu_custom_call.1} parent=1 // pred_check_branch
      %24 = sbr.rel (0) target = $region9
    $region8: #{tpu_custom_call.1} parent=1 // pred_region
      %26 = vsyncadd [#allocation7], 0
      %s28 = sshll.u32 %s1, 4
      %s29 = int_to_ptr.hbm [resolvable:$true] %s28
      %s30 = sshll.u32 [#allocation6], 4
      %s31 = int_to_ptr.vmem [resolvable:$true] %s30
      %33 = dma.hbm_to_vmem [thread:$0]  %s29, 32, %s31, [#allocation7]
    $region9: #{tpu_custom_call.1} parent=1 // pred_fallthru
      _
    // Predicated region
    $region10: #{tpu_custom_call.1} parent=1 // pred_check
      _
    $region11: #{tpu_custom_call.1} parent=1 // pred_check_branch
      %35 = sbr.rel (0) target = $region13
    $region12: #{tpu_custom_call.1} parent=1 // pred_region
      %37 = vsyncadd [#allocation5], 0
      %s39 = sshll.u32 %s2, 4
      %s40 = int_to_ptr.vmem [resolvable:$true] %s39
      %42 = dma.vmem_to_smem %s40, 16, [#allocation8], [#allocation5]
    $region13: #{tpu_custom_call.1} parent=1 // pred_fallthru
      _
    // Predicated region
    $region14: #{tpu_custom_call.1} parent=1 // pred_check
      _
    $region15: #{tpu_custom_call.1} parent=1 // pred_check_branch
      %44 = sbr.rel (0) target = $region17
    $region16: #{tpu_custom_call.1} parent=1 // pred_region
      %46 = dma.done [#allocation3], 32
    $region17: #{tpu_custom_call.1} parent=1 // pred_fallthru
      _
    // Predicated region
    $region18: #{tpu_custom_call.1} parent=1 // pred_check
      _
    $region19: #{tpu_custom_call.1} parent=1 // pred_check_branch
      %48 = sbr.rel (0) target = $region21
    $region20: #{tpu_custom_call.1} parent=1 // pred_region
      %50 = dma.done [#allocation7], 32
    $region21: #{tpu_custom_call.1} parent=1 // pred_fallthru
      _
    // Predicated region
    $region22: #{tpu_custom_call.1} parent=1 // pred_check
      _
    $region23: #{tpu_custom_call.1} parent=1 // pred_check_branch
      %52 = sbr.rel (0) target = $region25
    $region24: #{tpu_custom_call.1} parent=1 // pred_region
      %54 = dma.done [#allocation5], 16
    $region25: #{tpu_custom_call.1} parent=1 // pred_fallthru
      _
    %55 = sfence
    %v56 = vld [vmem:[#allocation2] sm:$0x3]
    %v57 = vld [vmem:[#allocation6] sm:$0x3]
    %v58 = vsub.f32 %v56, %v57
    %60 = vrot.lane.b32.xlu0 %v58, 112
    %v61 = vpop.permute.xlu0 %60
    %v63 = vadd.f32 %v58, %v61
    %v64 = vmax.f32 %v58, %v61
    %65 = vrot.lane.b32.xlu0 %v58, 96
    %v66 = vpop.permute.xlu0 %65
    %v68 = vadd.f32 %v63, %v66
    %v69 = vmax.f32 %v64, %v66
    %70 = vrot.lane.b32.xlu0 %v58, 80
    %v71 = vpop.permute.xlu0 %70
    %v73 = vadd.f32 %v68, %v71
    %v74 = vmax.f32 %v69, %v71
    %v75 = vmul.f32 %v73, 0.25
    %s76 = sld [smem:[#allocation8]]
    %78 = vrot.lane.b32.xlu0 %v75, 1
    %v79 = vpop.permute.xlu0 %78
    %vm81 = vcmask 7168
    %v82 = vsel %vm81, 0.0, %v79
    %v83 = vstv %s76
    %v84 = vmul.f32 %v83, %v82
    %v85 = vadd.f32 %v84, 0.0
    %s86 = sld [smem:[#allocation8 + $0x3]]
    %88 = vrot.lane.b32.xlu0 %v74, 1
    %v89 = vpop.permute.xlu0 %88
    %v91 = vsel %vm81, 0.0, %v89
    %v92 = vstv %s86
    %v93 = vmul.f32 %v92, %v91
    %v94 = vadd.f32 %v85, %v93
    %s95 = sld [smem:[#allocation8 + $0x1]]
    %v96 = vstv %s95
    %v97 = vmul.f32 %v96, %v75
    %v98 = vadd.f32 %v94, %v97
    %s99 = sld [smem:[#allocation8 + $0x4]]
    %v100 = vstv %s99
    %v101 = vmul.f32 %v100, %v74
    %v102 = vadd.f32 %v98, %v101
    %s103 = sld [smem:[#allocation8 + $0x2]]
    %104 = vrot.lane.b32.xlu0 %v75, 127
    %v105 = vpop.permute.xlu0 %104
    %vm107 = vcmask 121856
    %v108 = vsel %vm107, %v105, 0.0
    %v109 = vstv %s103
    %v110 = vmul.f32 %v109, %v108
    %v111 = vadd.f32 %v102, %v110
    %s112 = sld [smem:[#allocation8 + $0x5]]
    %113 = vrot.lane.b32.xlu0 %v74, 127
    %v114 = vpop.permute.xlu0 %113
    %v116 = vsel %vm107, %v114, 0.0
    %v117 = vstv %s112
    %v118 = vmul.f32 %v117, %v116
    %v119 = vadd.f32 %v111, %v118
    %v120 = vxor.u32 %v119, 2147483648
    %v121 = vmul.f32 %v120, 1.442695
    %v122 = vpow.pop %v121
    %v123 = vadd.f32 %v122, 1.0
    %v124 = vrcp.pop %v123
    %v125 = vmul.f32 %v123, %v124
    %v126 = vsub.f32 1.0, %v125
    %v127 = vmul.f32 %v124, %v126
    %v128 = vadd.f32 %v124, %v127
    %vm129 = vweird.f32 %v123
    %vm130 = vweird.f32 %v124
    %vm131 = vmor %vm129, %vm130
    %v132 = vsel %vm131, %v124, %v128
    %v133 = vand.u32 2147483647, %v123
    %vm134 = vcmp.eq.f32.partialorder %v133, 8.507059e+37
    %v135 = vand.u32 %v123, 2147483648
    %v136 = vor.u32 1.1754944e-38, %v135
    %v137 = vsel %vm134, %v136, %v132
    %v138 = vmul.f32 1.0, %v137
    %140 = vrot.lane.b32.xlu0 %v138, 16
    %v141 = vpop.permute.xlu0 %140
    %143 = vrot.lane.b32.xlu0 %v138, 32
    %v144 = vpop.permute.xlu0 %143
    %146 = vrot.lane.b32.xlu0 %v138, 48
    %v147 = vpop.permute.xlu0 %146
    %vm149 = vcmask 130048
    %v150 = vsel %vm149, %v138, %v141
    %vm151 = vcmask 261120
    %v152 = vsel %vm151, %v150, %v144
    %vm153 = vcmask 392192
    %v154 = vsel %vm153, %v152, %v147
    %v155 = vmul.f32 %v154, %v58
    %v156 = vadd.f32 %v57, %v155
    %vm157 = vcmask 123904
    %v158 = vsel %vm157, %v156, 0.0
    %159 = vadd.xlane.f32.xlu0 %v158
    %v160 = vpop.xlane.xlu0 %159
    %v161 = vmul.f32 %v160, 0.0625
    %v162 = vsel %vm157, %v156, -inf
    %163 = vmax.xlane.f32.xlu0 %v162
    %v164 = vpop.xlane.xlu0 %163
    %166 = vrot.lane.b32.xlu0 %v156, 112
    %v167 = vpop.permute.xlu0 %166
    %v169 = vsel %vm157, %v167, 0.0
    %170 = vadd.xlane.f32.xlu0 %v169
    %v171 = vpop.xlane.xlu0 %170
    %v172 = vmul.f32 %v171, 0.0625
    %vm173 = vcmask 255104
    %v174 = vsel %vm173, %v156, -inf
    %175 = vmax.xlane.f32.xlu0 %v174
    %v176 = vpop.xlane.xlu0 %175
    %177 = vrot.lane.b32.xlu0 %v156, 96
    %v178 = vpop.permute.xlu0 %177
    %v180 = vsel %vm157, %v178, 0.0
    %181 = vadd.xlane.f32.xlu0 %v180
    %v182 = vpop.xlane.xlu0 %181
    %v183 = vmul.f32 %v182, 0.0625
    %vm184 = vcmask 386304
    %v185 = vsel %vm184, %v156, -inf
    %186 = vmax.xlane.f32.xlu0 %v185
    %v187 = vpop.xlane.xlu0 %186
    %188 = vrot.lane.b32.xlu0 %v156, 80
    %v189 = vpop.permute.xlu0 %188
    %v191 = vsel %vm157, %v189, 0.0
    %192 = vadd.xlane.f32.xlu0 %v191
    %v193 = vpop.xlane.xlu0 %192
    %v194 = vmul.f32 %v193, 0.0625
    %vm195 = vcmask 517504
    %v196 = vsel %vm195, %v156, -inf
    %197 = vmax.xlane.f32.xlu0 %v196
    %v198 = vpop.xlane.xlu0 %197
    %s199 = sld [smem:[#allocation8 + $0x6]]
    %v200 = vstv %s199
    %v201 = vmul.f32 %v161, %v200
    %s202 = sld [smem:[#allocation8 + $0x7]]
    %v203 = vstv %s202
    %v204 = vmul.f32 %v172, %v203
    %v205 = vadd.f32 %v201, %v204
    %s206 = sld [smem:[#allocation8 + $0x8]]
    %v207 = vstv %s206
    %v208 = vmul.f32 %v183, %v207
    %v209 = vadd.f32 %v205, %v208
    %s210 = sld [smem:[#allocation8 + $0x9]]
    %v211 = vstv %s210
    %v212 = vmul.f32 %v194, %v211
    %v213 = vadd.f32 %v209, %v212
    %v214 = vmax.f32 %v213, 0.0
    %s215 = sld [smem:[#allocation8 + $0xa]]
    %v216 = vstv %s215
    %v217 = vmul.f32 %v161, %v216
    %s218 = sld [smem:[#allocation8 + $0xb]]
    %v219 = vstv %s218
    %v220 = vmul.f32 %v172, %v219
    %v221 = vadd.f32 %v217, %v220
    %s222 = sld [smem:[#allocation8 + $0xc]]
    %v223 = vstv %s222
    %v224 = vmul.f32 %v183, %v223
    %v225 = vadd.f32 %v221, %v224
    %s226 = sld [smem:[#allocation8 + $0xd]]
    %v227 = vstv %s226
    %v228 = vmul.f32 %v194, %v227
    %v229 = vadd.f32 %v225, %v228
    %v230 = vmax.f32 %v229, 0.0
    %s231 = sld [smem:[#allocation8 + $0xe]]
    %v232 = vstv %s231
    %v233 = vmul.f32 %v214, %v232
    %s234 = sld [smem:[#allocation8 + $0xf]]
    %v235 = vstv %s234
    %v236 = vmul.f32 %v230, %v235
    %v237 = vadd.f32 %v233, %v236
    %s238 = sld [smem:[#allocation8 + $0x10]]
    %v239 = vstv %s238
    %v240 = vmul.f32 %v214, %v239
    %s241 = sld [smem:[#allocation8 + $0x11]]
    %v242 = vstv %s241
    %v243 = vmul.f32 %v230, %v242
    %v244 = vadd.f32 %v240, %v243
    %s245 = sld [smem:[#allocation8 + $0x12]]
    %v246 = vstv %s245
    %v247 = vmul.f32 %v214, %v246
    %s248 = sld [smem:[#allocation8 + $0x13]]
    %v249 = vstv %s248
    %v250 = vmul.f32 %v230, %v249
    %v251 = vadd.f32 %v247, %v250
    %s252 = sld [smem:[#allocation8 + $0x14]]
    %v253 = vstv %s252
    %v254 = vmul.f32 %v214, %v253
    %s255 = sld [smem:[#allocation8 + $0x15]]
    %v256 = vstv %s255
    %v257 = vmul.f32 %v230, %v256
    %v258 = vadd.f32 %v254, %v257
    %v259 = vmul.f32 %v164, %v200
    %v260 = vmul.f32 %v176, %v203
    %v261 = vadd.f32 %v259, %v260
    %v262 = vmul.f32 %v187, %v207
    %v263 = vadd.f32 %v261, %v262
    %v264 = vmul.f32 %v198, %v211
    %v265 = vadd.f32 %v263, %v264
    %v266 = vmax.f32 %v265, 0.0
    %v267 = vmul.f32 %v164, %v216
    %v268 = vmul.f32 %v176, %v219
    %v269 = vadd.f32 %v267, %v268
    %v270 = vmul.f32 %v187, %v223
    %v271 = vadd.f32 %v269, %v270
    %v272 = vmul.f32 %v198, %v227
    %v273 = vadd.f32 %v271, %v272
    %v274 = vmax.f32 %v273, 0.0
    %v275 = vmul.f32 %v266, %v232
    %v276 = vmul.f32 %v274, %v235
    %v277 = vadd.f32 %v275, %v276
    %v278 = vmul.f32 %v266, %v239
    %v279 = vmul.f32 %v274, %v242
    %v280 = vadd.f32 %v278, %v279
    %v281 = vmul.f32 %v266, %v246
    %v282 = vmul.f32 %v274, %v249
    %v283 = vadd.f32 %v281, %v282
    %v284 = vmul.f32 %v266, %v253
    %v285 = vmul.f32 %v274, %v256
    %v286 = vadd.f32 %v284, %v285
    %v287 = vadd.f32 %v237, %v277
    %v288 = vxor.u32 %v287, 2147483648
    %v289 = vmul.f32 %v288, 1.442695
    %v290 = vpow.pop %v289
    %v291 = vadd.f32 %v290, 1.0
    %v292 = vrcp.pop %v291
    %v293 = vmul.f32 %v291, %v292
    %v294 = vsub.f32 1.0, %v293
    %v295 = vmul.f32 %v292, %v294
    %v296 = vadd.f32 %v292, %v295
    %vm297 = vweird.f32 %v291
    %vm298 = vweird.f32 %v292
    %vm299 = vmor %vm297, %vm298
    %v300 = vsel %vm299, %v292, %v296
    %v301 = vand.u32 2147483647, %v291
    %vm302 = vcmp.eq.f32.partialorder %v301, 8.507059e+37
    %v303 = vand.u32 %v291, 2147483648
    %v304 = vor.u32 1.1754944e-38, %v303
    %v305 = vsel %vm302, %v304, %v300
    %v306 = vmul.f32 1.0, %v305
    %v307 = vmul.f32 %v306, %v156
    %v308 = vadd.f32 %v244, %v280
    %v309 = vxor.u32 %v308, 2147483648
    %v310 = vmul.f32 %v309, 1.442695
    %v311 = vpow.pop %v310
    %v312 = vadd.f32 %v311, 1.0
    %v313 = vrcp.pop %v312
    %v314 = vmul.f32 %v312, %v313
    %v315 = vsub.f32 1.0, %v314
    %v316 = vmul.f32 %v313, %v315
    %v317 = vadd.f32 %v313, %v316
    %vm318 = vweird.f32 %v312
    %vm319 = vweird.f32 %v313
    %vm320 = vmor %vm318, %vm319
    %v321 = vsel %vm320, %v313, %v317
    %v322 = vand.u32 2147483647, %v312
    %vm323 = vcmp.eq.f32.partialorder %v322, 8.507059e+37
    %v324 = vand.u32 %v312, 2147483648
    %v325 = vor.u32 1.1754944e-38, %v324
    %v326 = vsel %vm323, %v325, %v321
    %v327 = vmul.f32 1.0, %v326
    %v328 = vmul.f32 %v327, %v156
    %v329 = vadd.f32 %v251, %v283
    %v330 = vxor.u32 %v329, 2147483648
    %v331 = vmul.f32 %v330, 1.442695
    %v332 = vpow.pop %v331
    %v333 = vadd.f32 %v332, 1.0
    %v334 = vrcp.pop %v333
    %v335 = vmul.f32 %v333, %v334
    %v336 = vsub.f32 1.0, %v335
    %v337 = vmul.f32 %v334, %v336
    %v338 = vadd.f32 %v334, %v337
    %vm339 = vweird.f32 %v333
    %vm340 = vweird.f32 %v334
    %vm341 = vmor %vm339, %vm340
    %v342 = vsel %vm341, %v334, %v338
    %v343 = vand.u32 2147483647, %v333
    %vm344 = vcmp.eq.f32.partialorder %v343, 8.507059e+37
    %v345 = vand.u32 %v333, 2147483648
    %v346 = vor.u32 1.1754944e-38, %v345
    %v347 = vsel %vm344, %v346, %v342
    %v348 = vmul.f32 1.0, %v347
    %v349 = vmul.f32 %v348, %v156
    %v350 = vadd.f32 %v258, %v286
    %v351 = vxor.u32 %v350, 2147483648
    %v352 = vmul.f32 %v351, 1.442695
    %v353 = vpow.pop %v352
    %v354 = vadd.f32 %v353, 1.0
    %v355 = vrcp.pop %v354
    %v356 = vmul.f32 %v354, %v355
    %v357 = vsub.f32 1.0, %v356
    %v358 = vmul.f32 %v355, %v357
    %v359 = vadd.f32 %v355, %v358
    %vm360 = vweird.f32 %v354
    %vm361 = vweird.f32 %v355
    %vm362 = vmor %vm360, %vm361
    %v363 = vsel %vm362, %v355, %v359
    %v364 = vand.u32 2147483647, %v354
    %vm365 = vcmp.eq.f32.partialorder %v364, 8.507059e+37
    %v366 = vand.u32 %v354, 2147483648
    %v367 = vor.u32 1.1754944e-38, %v366
    %v368 = vsel %vm365, %v367, %v363
    %v369 = vmul.f32 1.0, %v368
    %v370 = vmul.f32 %v369, %v156
    %v371 = vsel %vm149, %v307, %v328
    %v372 = vsel %vm151, %v371, %v349
    %v373 = vsel %vm153, %v372, %v370
    %vm374 = vcmask 517120
    %375 = vst.msk [vmem:[#allocation9] sm:$0x3] %vm374, %v373
    // Predicated region
    $region26: #{tpu_custom_call.1} parent=1 // pred_check
      _
    $region27: #{tpu_custom_call.1} parent=1 // pred_check_branch
      %377 = sbr.rel (0) target = $region29
    $region28: #{tpu_custom_call.1} parent=1 // pred_region
      %379 = vsyncadd [#allocation4], 0
      %s381 = sshll.u32 [#allocation9], 4
      %s382 = int_to_ptr.vmem [resolvable:$true] %s381
      %s383 = sshll.u32 %s3, 4
      %s384 = int_to_ptr.hbm [resolvable:$true] %s383
      %386 = dma.vmem_to_hbm [thread:$0]  %s382, 32, %s384, [#allocation4]
    $region29: #{tpu_custom_call.1} parent=1 // pred_fallthru
      _
    // Predicated region
    $region30: #{tpu_custom_call.1} parent=1 // pred_check
      _
    $region31: #{tpu_custom_call.1} parent=1 // pred_check_branch
      %388 = sbr.rel (0) target = $region33
    $region32: #{tpu_custom_call.1} parent=1 // pred_region
      %390 = dma.done [#allocation4], 32
    $region33: #{tpu_custom_call.1} parent=1 // pred_fallthru
      _
    %391 = vsyncpa [#allocation3], 1
    %392 = vsyncpa [#allocation7], 1
    %393 = vsyncpa [#allocation4], 1
    %394 = vsyncpa [#allocation5], 1

</llo_original>
